<compile_context>
chip_gen: v7x
topology: tpu7x:2x2x1
jax: 0.10.0
libtpu: 0.0.40
codegen_flags: <defaults>
</compile_context>

<pallas_src>
import functools

import jax
import jax.numpy as jnp
from jax.experimental import pallas as pl
from jax.experimental.pallas import tpu as pltpu


def _cdiv(a: int, b: int) -> int:
    return -(-a // b)


def _round_up(x: int, m: int) -> int:
    return ((x + m - 1) // m) * m


def ganloss_kernel(prob_ref, target_ref, reward_ref, out_ref, *, tn: int,
                   tc: int, n_rows: int):
    i = pl.program_id(0)   # row-tile index   ("parallel")
    j = pl.program_id(1)   # class-tile index ("arbitrary" reduction)

    # Zero this row tile's resident partial-sum block at the first class tile.
    @pl.when(j == 0)
    def _():
        out_ref[...] = jnp.zeros_like(out_ref)

    prob = prob_ref[...].astype(jnp.float32)        # (TN, TC), f32 accumulation
    tgt = target_ref[...]                           # (TN, 1) int32
    rew = reward_ref[...].astype(jnp.float32)       # (TN, 1) f32

    # Select prob[r, target[r]] within this class tile.  Ragged/OOB class
    # columns never match (target < C); select never propagates garbage.
    col = jax.lax.broadcasted_iota(jnp.int32, prob.shape, 1) + j * tc
    row_val = jnp.sum(jnp.where(col == tgt, prob, 0.0), axis=1, keepdims=True)

    # Row guard for the ragged last row tile: OOB rows (possibly NaN garbage
    # in prob/target/reward) must contribute exactly 0 -> select, not multiply.
    row = jax.lax.broadcasted_iota(jnp.int32, rew.shape, 0) + i * tn
    contrib = jnp.where(row < n_rows, row_val * rew, 0.0)

    # Accumulate into the resident (1, 8, 128) block (scalar broadcast add).
    out_ref[...] += jnp.sum(contrib)


def gan_loss(prob, target, reward, *, max_tn: int = 512, max_tc: int = 2048):
    """prob: (N, C) float (f32 or bf16), target: (N,) int, reward: (N,) float.

    Returns the scalar f32 loss = -sum(prob[arange(N), target] * reward).
    """
    N, C = prob.shape

    # Class tiling: full C if it fits (block == full dim is always legal),
    # else balanced tiles that are multiples of 128 lanes.
    if C <= max_tc:
        TC = C
    else:
        TC = _round_up(_cdiv(C, _cdiv(C, max_tc)), 128)

    # Row tiling: full N if it fits, else a fixed tile that is a multiple of
    # 32 sublanes (covers f32/bf16/int8 packing).  Ragged last tile is masked
    # in-kernel, so no wrapper-side padding of prob is needed.
    TN = N if N <= max_tn else max_tn

    grid = (_cdiv(N, TN), _cdiv(C, TC))
    n_row_tiles = grid[0]
    itemsize = jnp.dtype(prob.dtype).itemsize

    out = pl.pallas_call(
        functools.partial(ganloss_kernel, tn=TN, tc=TC, n_rows=N),
        out_shape=jax.ShapeDtypeStruct((n_row_tiles, 8, 128), jnp.float32),
        grid_spec=pltpu.PrefetchScalarGridSpec(
            num_scalar_prefetch=0,
            grid=grid,
            in_specs=[
                pl.BlockSpec((TN, TC), lambda i, j: (i, j)),   # prob (streamed)
                pl.BlockSpec((TN, 1), lambda i, j: (i, 0)),    # target (resident over j)
                pl.BlockSpec((TN, 1), lambda i, j: (i, 0)),    # reward (resident over j)
            ],
            out_specs=pl.BlockSpec((1, 8, 128), lambda i, j: (i, 0, 0)),
        ),
        compiler_params=pltpu.CompilerParams(
            # Row tiles write disjoint output blocks -> safe to shard across
            # TensorCores on v7x.  Class axis is the reduction -> arbitrary.
            dimension_semantics=("parallel", "arbitrary"),
            vmem_limit_bytes=32 * 1024 * 1024,
        ),
        cost_estimate=pl.CostEstimate(
            flops=2 * N * C,
            transcendentals=0,
            bytes_accessed=N * C * itemsize + 2 * N * 4
            + n_row_tiles * 8 * 128 * 4,
        ),
    )(
        prob,
        target.astype(jnp.int32).reshape(N, 1),
        reward.astype(jnp.float32).reshape(N, 1),
    )

    # Each (8,128) block holds its row tile's partial sum broadcast to every
    # element; pick one lane per tile and finish the tiny reduction in XLA.
    return -jnp.sum(out[:, 0, 0])


if __name__ == "__main__":
    key = jax.random.PRNGKey(0)
    kp, kt, kr = jax.random.split(key, 3)

    # Small shapes consistent with the module: (N, C) prob, (N,) target/reward.
    N, C = 8, 32
    logits = jax.random.normal(kp, (N, C), dtype=jnp.float32)
    prob = jax.nn.log_softmax(logits, axis=-1)   # SeqGAN passes log-probs
    target = jax.random.randint(kt, (N,), 0, C, dtype=jnp.int32)
    reward = jax.random.uniform(kr, (N,), dtype=jnp.float32)

    loss = gan_loss(prob, target, reward)
    jax.block_until_ready(loss)

    # Pure-JAX reference.
    ref = -jnp.sum(prob[jnp.arange(N), target] * reward)
    assert jnp.allclose(loss, ref, rtol=1e-6, atol=1e-6), (loss, ref)

    print("KERNEL_OK")
</pallas_src>

<mosaic_0001>
module attributes {stable_mosaic.version = 11 : i64} {
  func.func @ganloss_kernel(%arg0: i32, %arg1: i32, %arg2: memref<8x32xf32, #tpu.memory_space<vmem>>, %arg3: memref<8x1xi32, #tpu.memory_space<vmem>>, %arg4: memref<8x1xf32, #tpu.memory_space<vmem>>, %arg5: memref<1x8x128xf32, #tpu.memory_space<vmem>>) attributes {dimension_semantics = [#tpu.dimension_semantics<parallel>, #tpu.dimension_semantics<arbitrary>], iteration_bounds = array<i64: 1, 1>, scalar_prefetch = 0 : i64, scratch_operands = 0 : i64, tpu.core_type = #tpu.core_type<tc>, window_params = [{transform_indices = @transform_0, window_bounds = array<i64: 8, 32>}, {transform_indices = @transform_1, window_bounds = array<i64: 8, 1>}, {transform_indices = @transform_2, window_bounds = array<i64: 8, 1>}, {transform_indices = @transform_3, window_bounds = array<i64: 1, 8, 128>}]} {
    %c0_i32 = arith.constant 0 : i32
    %0 = arith.cmpi eq, %arg1, %c0_i32 : i32
    %1 = arith.extui %0 : i1 to i32
    %c0_i32_0 = arith.constant 0 : i32
    %2 = arith.cmpi ne, %1, %c0_i32_0 : i32
    scf.if %2 {
      %cst_16 = arith.constant 0.000000e+00 : f32
      %33 = vector.broadcast %cst_16 : f32 to vector<1x8x128xf32>
      %c0_17 = arith.constant 0 : index
      %c0_18 = arith.constant 0 : index
      %c0_19 = arith.constant 0 : index
      %34 = vector.load %arg5[%c0_17, %c0_18, %c0_19] : memref<1x8x128xf32, #tpu.memory_space<vmem>>, vector<1x8x128xf32>
      tpu.vector_store %arg5[%c0_17, %c0_18, %c0_19], %33 {strides = array<i32>} : memref<1x8x128xf32, #tpu.memory_space<vmem>>, vector<1x8x128xf32>,
    } else {
    }
    %c0 = arith.constant 0 : index
    %c0_1 = arith.constant 0 : index
    %3 = vector.load %arg2[%c0, %c0_1] : memref<8x32xf32, #tpu.memory_space<vmem>>, vector<8x32xf32>
    %c0_2 = arith.constant 0 : index
    %c0_3 = arith.constant 0 : index
    %4 = vector.load %arg3[%c0_2, %c0_3] : memref<8x1xi32, #tpu.memory_space<vmem>>, vector<8x1xi32>
    %c0_4 = arith.constant 0 : index
    %c0_5 = arith.constant 0 : index
    %5 = vector.load %arg4[%c0_4, %c0_5] : memref<8x1xf32, #tpu.memory_space<vmem>>, vector<8x1xf32>
    %6 = tpu.iota {dimensions = array<i32: 1>} : vector<8x32xi32>
    %c32_i32 = arith.constant 32 : i32
    %7 = arith.muli %arg1, %c32_i32 : i32
    %8 = vector.broadcast %7 : i32 to vector<8x32xi32>
    %9 = arith.addi %6, %8 : vector<8x32xi32>
    %10 = vector.broadcast %4 : vector<8x1xi32> to vector<8x32xi32>
    %11 = arith.cmpi eq, %9, %10 : vector<8x32xi32>
    %cst = arith.constant 0.000000e+00 : f32
    %12 = vector.broadcast %cst : f32 to vector<8x32xf32>
    %13 = arith.select %11, %3, %12 : vector<8x32xi1>, vector<8x32xf32>
    %cst_6 = arith.constant dense<0.000000e+00> : vector<8xf32>
    %14 = vector.multi_reduction <add>, %13, %cst_6 [1] : vector<8x32xf32> to vector<8xf32>
    %15 = vector.shape_cast %14 : vector<8xf32> to vector<8x1xf32>
    %16 = tpu.iota {dimensions = array<i32: 0>} : vector<8x1xi32>
    %c8_i32 = arith.constant 8 : i32
    %17 = arith.muli %arg0, %c8_i32 : i32
    %18 = vector.broadcast %17 : i32 to vector<8x1xi32>
    %19 = arith.addi %16, %18 : vector<8x1xi32>
    %c8_i32_7 = arith.constant 8 : i32
    %20 = vector.broadcast %c8_i32_7 : i32 to vector<8x1xi32>
    %21 = arith.cmpi slt, %19, %20 : vector<8x1xi32>
    %22 = arith.mulf %15, %5 : vector<8x1xf32>
    %cst_8 = arith.constant 0.000000e+00 : f32
    %23 = vector.broadcast %cst_8 : f32 to vector<8x1xf32>
    %24 = arith.select %21, %22, %23 : vector<8x1xi1>, vector<8x1xf32>
    %c0_9 = arith.constant 0 : index
    %c0_10 = arith.constant 0 : index
    %c0_11 = arith.constant 0 : index
    %25 = vector.load %arg5[%c0_9, %c0_10, %c0_11] : memref<1x8x128xf32, #tpu.memory_space<vmem>>, vector<1x8x128xf32>
    %26 = vector.shape_cast %24 : vector<8x1xf32> to vector<1x8x1xf32>
    %cst_12 = arith.constant dense<0.000000e+00> : vector<1xf32>
    %27 = vector.multi_reduction <add>, %26, %cst_12 [1, 2] : vector<1x8x1xf32> to vector<1xf32>
    %28 = vector.shape_cast %27 : vector<1xf32> to vector<1x1x1xf32>
    %29 = vector.extract %28[0, 0, 0] : f32 from vector<1x1x1xf32>
    %30 = vector.broadcast %29 : f32 to vector<1x8x128xf32>
    %31 = arith.addf %25, %30 : vector<1x8x128xf32>
    %c0_13 = arith.constant 0 : index
    %c0_14 = arith.constant 0 : index
    %c0_15 = arith.constant 0 : index
    %32 = vector.load %arg5[%c0_13, %c0_14, %c0_15] : memref<1x8x128xf32, #tpu.memory_space<vmem>>, vector<1x8x128xf32>
    tpu.vector_store %arg5[%c0_13, %c0_14, %c0_15], %31 {strides = array<i32>} : memref<1x8x128xf32, #tpu.memory_space<vmem>>, vector<1x8x128xf32>,
    return
  }
  func.func @transform_0(%arg0: i32, %arg1: i32) -> (i32, i32) {
    %c0_i32 = arith.constant 0 : i32
    return %arg0, %arg1 : i32, i32
  }
  func.func @transform_1(%arg0: i32, %arg1: i32) -> (i32, i32) {
    %c0_i32 = arith.constant 0 : i32
    %c0_i32_0 = arith.constant 0 : i32
    return %arg0, %c0_i32 : i32, i32
  }
  func.func @transform_2(%arg0: i32, %arg1: i32) -> (i32, i32) {
    %c0_i32 = arith.constant 0 : i32
    %c0_i32_0 = arith.constant 0 : i32
    return %arg0, %c0_i32 : i32, i32
  }
  func.func @transform_3(%arg0: i32, %arg1: i32) -> (i32, i32, i32) {
    %c0_i32 = arith.constant 0 : i32
    %c0_i32_0 = arith.constant 0 : i32
    %c0_i32_1 = arith.constant 0 : i32
    return %arg0, %c0_i32, %c0_i32_0 : i32, i32, i32
  }
}

</mosaic_0001>

<llo_original>
// kernel: tpu_custom_call.1
$region0: #{tpu_custom_call.1}
  #allocation0 [shape = 'u32[]', space=smem, size = 0x4, offset = 0x4, fixed_abs, tag = 'smem constant byte address 0x4 - core index']
  #allocation1 [shape = 'u32[144,128]{1,0:T(1,128)}', space=vmem, size = 0x12000, scoped, tag = 'internal scratch']
  %s0 = inlined_call_operand.vmem [shape: f32[8,32], index: 0, kind: input, shape index: {}]
  %s1 = inlined_call_operand.vmem [shape: s32[8,1], index: 1, kind: input, shape index: {}]
  %s2 = inlined_call_operand.vmem [shape: f32[8,1], index: 2, kind: input, shape index: {}]
  %s3 = inlined_call_operand.hbm [shape: f32[1,8,128], index: 3, kind: output, shape index: {}]
  %s4 = sld [smem:[#allocation0]]
  $region26: #{tpu_custom_call.1} parent=0
    _
  %s6 = ssub.s32 1, %s4
  %s7 = scalar_select 0, %s6, %s4
  $region1: #{tpu_custom_call.1} parent=0
    #allocation2 [shape = 'u8[4096]{0}', space=vmem, size = 0x1000, scoped, tag = 'output window, operand 0, single buffered']
    #allocation3 [shape = 's32[1]{0}', space=sflag, size = 0x4, scoped, tag = 'scoped memory for tpu_custom_call.1']
    %8 = vsyncpa [#allocation3], 0
    // Predicated region
    $region2: #{tpu_custom_call.1} parent=1 // pred_check
      _
    $region3: #{tpu_custom_call.1} parent=1 // pred_check_branch
      %10 = sbr.rel (0) target = $region5
    $region4: #{tpu_custom_call.1} parent=1 // pred_region
      _
    $region5: #{tpu_custom_call.1} parent=1 // pred_fallthru
      _
    // Predicated region
    $region6: #{tpu_custom_call.1} parent=1 // pred_check
      _
    $region7: #{tpu_custom_call.1} parent=1 // pred_check_branch
      %12 = sbr.rel (0) target = $region9
    $region8: #{tpu_custom_call.1} parent=1 // pred_region
      _
    $region9: #{tpu_custom_call.1} parent=1 // pred_fallthru
      _
    // Predicated region
    $region10: #{tpu_custom_call.1} parent=1 // pred_check
      _
    $region11: #{tpu_custom_call.1} parent=1 // pred_check_branch
      %14 = sbr.rel (0) target = $region13
    $region12: #{tpu_custom_call.1} parent=1 // pred_region
      _
    $region13: #{tpu_custom_call.1} parent=1 // pred_fallthru
      _
    %p15 = scmp.eq.s32.totalorder 0, 0
    // Predicated region
    $region14: #{tpu_custom_call.1} parent=1 // pred_check
      %p16 = pneg %p15
    $region15: #{tpu_custom_call.1} parent=1 // pred_check_branch
      %18 = sbr.rel (%p16) target = $region17
    $region16: #{tpu_custom_call.1} parent=1 // pred_region
      %19 = vst [vmem:[#allocation2] sm:$0xff] 0.0
    $region17: #{tpu_custom_call.1} parent=1 // pred_fallthru
      _
    %v20 = vld [vmem:[%s0] sm:$0xff]
    %v21 = vld [vmem:[%s1] sm:$0xff]
    %v22 = vld [vmem:[%s2] sm:$0xff]
    %v23 = vlaneseq
    %v24 = vand.u32 %v23, 127
    %s25 = smul.u32 0, 32
    %v26 = vstv %s25
    %v27 = vadd.s32 %v24, %v26
    %28 = vset.pattern.permute.xlu0 0
    %29 = vperm.xlu0 %28, %v21
    %v30 = vpop.permute.xlu0 %29
    %vm31 = vcmp.eq.s32.totalorder %v27, %v30
    %v32 = vsel %vm31, %v20, 0.0
    %vm33 = vcmask 261120
    %v34 = vsel %vm33, %v32, 0.0
    %35 = vadd.xlane.f32.xlu0 %v34
    %v36 = vpop.xlane.xlu0 %35
    %v37 = vlaneseq
    %v38 = vshrl.u32 %v37, 7
    %s39 = smul.u32 0, 8
    %v40 = vstv %s39
    %v41 = vadd.s32 %v38, %v40
    %vm42 = vcmp.lt.s32.totalorder %v41, 8
    %v43 = vmul.f32 %v36, %v22
    %v44 = vsel %vm42, %v43, 0.0
    %v45 = vld [vmem:[#allocation2] sm:$0xff]
    %vm46 = vcmask 7168
    %v47 = vsel %vm46, %v44, 0.0
    %48 = vadd.xlane.f32.xlu0 %v47
    %v49 = vpop.xlane.xlu0 %48
    %v50 = vrot.slane %v49, 4
    %v51 = vadd.f32 %v49, %v50
    %v52 = vrot.slane %v51, 2
    %v53 = vadd.f32 %v51, %v52
    %v54 = vrot.slane %v53, 1
    %v55 = vadd.f32 %v53, %v54
    %s56 = vtos %v55
    %v57 = vstv %s56
    %v58 = vadd.f32 %v45, %v57
    %59 = vst [vmem:[#allocation2] sm:$0xff] %v58
    // Predicated region
    $region18: #{tpu_custom_call.1} parent=1 // pred_check
      _
    $region19: #{tpu_custom_call.1} parent=1 // pred_check_branch
      %61 = sbr.rel (0) target = $region21
    $region20: #{tpu_custom_call.1} parent=1 // pred_region
      %s63 = ssub.s32 128, 128
      %64 = vsyncadd [#allocation3], %s63
      %s66 = sshll.u32 [#allocation2], 4
      %s67 = int_to_ptr.vmem [resolvable:$true] %s66
      %69 = dma.vmem_to_hbm [thread:$0]  %s67, 128, %s3, [#allocation3]
    $region21: #{tpu_custom_call.1} parent=1 // pred_fallthru
      _
    // Predicated region
    $region22: #{tpu_custom_call.1} parent=1 // pred_check
      _
    $region23: #{tpu_custom_call.1} parent=1 // pred_check_branch
      %71 = sbr.rel (0) target = $region25
    $region24: #{tpu_custom_call.1} parent=1 // pred_region
      %72 = dma.done [#allocation3], 128
    $region25: #{tpu_custom_call.1} parent=1 // pred_fallthru
      _
    %73 = vsyncpa [#allocation3], 1

</llo_original>
